<compile_context>
chip_gen: v7x
topology: tpu7x:2x2x1
jax: 0.10.0
libtpu: 0.0.40
codegen_flags: <defaults>
</compile_context>

<pallas_src>
import functools

import jax
import jax.numpy as jnp
from jax import lax
from jax.experimental import pallas as pl
from jax.experimental.pallas import tpu as pltpu

_LANE = 128


def masked_head_kernel(x_ref, wqkv_ref, bqkv_ref, o_ref, qkv_scr, *, seq_len, batch_block):
    """One grid step: QKV-project a (batch_block*T, C) chunk, then causal attention per element."""
    T = seq_len
    Bb = batch_block
    Hp = o_ref.shape[-1]                       # lane-padded head size (multiple of 128)

    # Fused QKV projection: one bf16 MXU matmul (f32 accumulation) over the whole chunk
    # (M = Bb*T rows), staged into VMEM scratch so the per-batch loop below only keeps
    # (T, Hp)-sized tiles live.  The 1/sqrt(H) scale and biases were folded in by the wrapper.
    x_bf16 = x_ref[...].astype(jnp.bfloat16)
    qkv = jnp.dot(x_bf16, wqkv_ref[...], preferred_element_type=jnp.float32)
    qkv_scr[...] = qkv + bqkv_ref[...]                                # (Bb*T, 3*Hp), f32

    # Causal mask: built once per grid step, reused for every batch element in the chunk.
    row = lax.broadcasted_iota(jnp.int32, (T, T), 0)
    col = lax.broadcasted_iota(jnp.int32, (T, T), 1)
    causal = col <= row

    def attend(b, carry):
        r0 = pl.multiple_of(b * T, T)                                  # aligned row offset
        qb = qkv_scr[pl.ds(r0, T), 0 * Hp:1 * Hp].astype(jnp.bfloat16)  # 128-aligned lane slices
        kb = qkv_scr[pl.ds(r0, T), 1 * Hp:2 * Hp].astype(jnp.bfloat16)
        vb = qkv_scr[pl.ds(r0, T), 2 * Hp:3 * Hp].astype(jnp.bfloat16)

        # q @ k^T: contract the last dims directly (einsum 'qd,kd->qk' form, no k transpose).
        wei = lax.dot_general(qb, kb, (((1,), (1,)), ((), ())),
                              preferred_element_type=jnp.float32)      # (T, T) f32
        wei = jnp.where(causal, wei, -jnp.inf)

        # Numerically-stable softmax in f32; reciprocal runs on the otherwise-idle EUP slot.
        wei = wei - jnp.max(wei, axis=-1, keepdims=True)
        p = jnp.exp(wei)
        p = p * pl.reciprocal(jnp.sum(p, axis=-1, keepdims=True), approx=True)

        # TODO(synk): nn.Dropout(p=0.2) on attention weights is treated as eval-mode identity.
        ob = jnp.dot(p.astype(jnp.bfloat16), vb,
                     preferred_element_type=jnp.float32)               # (T, Hp)
        o_ref[pl.ds(r0, T), :] = ob.astype(o_ref.dtype)                # lane-dense unmasked store
        return carry

    # TODO(synk): for T >> 32 this should tile the KV axis flash-style with causal tile skipping;
    # the module's block_size is 32 so the (T, T) score tile stays tiny.
    lax.fori_loop(0, Bb, attend, 0, unroll=Bb <= 2)


def _sublane_granule(itemsize):
    return {4: 8, 2: 16, 1: 32}.get(itemsize, 8)


def _choose_batch_block(B, T, C, Hp, x_itemsize, *, vmem_budget=24 << 20, min_steps=4):
    """Largest batch chunk that fits a VMEM budget while keeping enough grid steps to pipeline."""
    granule = _sublane_granule(x_itemsize)

    def cost(bb):
        rows = bb * T
        # double-buffered x / out pipeline blocks + resident f32 qkv scratch
        return 2 * rows * (C * x_itemsize + Hp * 4) + rows * 3 * Hp * 4

    def legal(bb):
        rows = bb * T
        return rows == B * T or rows % granule == 0

    divisors = sorted((d for d in range(1, B + 1) if B % d == 0), reverse=True)
    for need_steps in (min(min_steps, B), 2, 1):
        for bb in divisors:                                            # largest chunk first
            if B // bb >= need_steps and legal(bb) and cost(bb) <= vmem_budget:
                return bb
    return B


def masked_head(x, wq, bq, wk, bk, wv, bv, *, batch_block=None):
    B, T, C = x.shape
    H = wq.shape[1]
    Hp = pl.cdiv(H, _LANE) * _LANE                                     # lane-pad the head dim

    # Fold the 1/sqrt(head_size) scale into the query projection (free at trace time) and
    # zero-pad each head slab to Hp lanes: in-kernel q/k/v slices become 128-aligned and the
    # output store lane-dense; zero padding contributes nothing to any contraction.
    scale = H ** (-0.5)

    def pad_head(w, b):
        wp = jnp.zeros((C, Hp), jnp.float32).at[:, :H].set(w.astype(jnp.float32))
        bp = jnp.zeros((1, Hp), jnp.float32).at[:, :H].set(b.reshape(1, H).astype(jnp.float32))
        return wp, bp

    wq_p, bq_p = pad_head(wq * scale, bq * scale)
    wk_p, bk_p = pad_head(wk, bk)
    wv_p, bv_p = pad_head(wv, bv)

    wqkv = jnp.concatenate([wq_p, wk_p, wv_p], axis=1).astype(jnp.bfloat16)  # (C, 3*Hp) resident
    bqkv = jnp.concatenate([bq_p, bk_p, bv_p], axis=1)                       # (1, 3*Hp) f32

    x_itemsize = jnp.dtype(x.dtype).itemsize
    if batch_block is None:
        batch_block = _choose_batch_block(B, T, C, Hp, x_itemsize)
    assert B % batch_block == 0, "batch must be divisible by batch_block"
    rows = batch_block * T
    granule = _sublane_granule(x_itemsize)
    assert rows == B * T or rows % granule == 0, "batch_block*T must be sublane-aligned"
    num_steps = B // batch_block

    # Free row-major reshape at the boundary keeps the in-kernel block 2-D and lane-dense.
    x2 = x.reshape(B * T, C)

    # Explicit VMEM cap (v7x has only 64 MiB physical; leave headroom above the estimate).
    est_bytes = (2 * rows * (C * x_itemsize + Hp * 4) + rows * 3 * Hp * 4
                 + C * 3 * Hp * 2 + 3 * Hp * 4)
    vmem_limit = int(min(64 << 20, max(2 * est_bytes, 16 << 20)))

    out2 = pl.pallas_call(
        functools.partial(masked_head_kernel, seq_len=T, batch_block=batch_block),
        out_shape=jax.ShapeDtypeStruct((B * T, Hp), jnp.float32),
        grid_spec=pltpu.PrefetchScalarGridSpec(
            num_scalar_prefetch=0,
            grid=(num_steps,),
            in_specs=[
                pl.BlockSpec((rows, C), lambda i: (i, 0)),             # x chunk (Bb*T, C)
                pl.BlockSpec((C, 3 * Hp), lambda i: (0, 0)),           # fused padded Wqkv (bf16)
                pl.BlockSpec((1, 3 * Hp), lambda i: (0, 0)),           # fused padded bqkv (f32)
            ],
            out_specs=pl.BlockSpec((rows, Hp), lambda i: (i, 0)),
            scratch_shapes=[pltpu.VMEM((rows, 3 * Hp), jnp.float32)],
        ),
        compiler_params=pltpu.CompilerParams(
            dimension_semantics=("parallel",),
            vmem_limit_bytes=vmem_limit,
        ),
    )(x2, wqkv, bqkv)

    # Drop the zero padding lanes and restore (B, T, H).
    return out2[:, :H].reshape(B, T, H).astype(x.dtype)


def reference_masked_head(x, wq, bq, wk, bk, wv, bv):
    """Pure-JAX reference (mirrors the PyTorch forward, dropout in eval mode)."""
    q = x @ wq + bq
    k = x @ wk + bk
    v = x @ wv + bv
    wei = jnp.einsum("btd,bsd->bts", q, k) * (k.shape[-1] ** -0.5)
    T = x.shape[1]
    mask = jnp.tril(jnp.ones((T, T), dtype=bool))
    wei = jnp.where(mask, wei, -jnp.inf)
    wei = jax.nn.softmax(wei, axis=-1)
    return jnp.einsum("bts,bsh->bth", wei, v)


if __name__ == "__main__":
    # Small shapes consistent with the module (block_size=32 so T<=32).
    B, T, d_model, head_size = 4, 8, 32, 16

    key = jax.random.PRNGKey(0)
    kx, kq, kbq, kk, kbk, kv_, kbv = jax.random.split(key, 7)

    x = jax.random.normal(kx, (B, T, d_model), dtype=jnp.float32)

    # Deterministic parameter init (nn.Linear(d_model, head_size) with bias),
    # stored pre-transposed as (d_model, head_size).
    s = 1.0 / (d_model ** 0.5)
    wq = jax.random.uniform(kq, (d_model, head_size), jnp.float32, -s, s)
    bq = jax.random.uniform(kbq, (1, head_size), jnp.float32, -s, s)
    wk = jax.random.uniform(kk, (d_model, head_size), jnp.float32, -s, s)
    bk = jax.random.uniform(kbk, (1, head_size), jnp.float32, -s, s)
    wv = jax.random.uniform(kv_, (d_model, head_size), jnp.float32, -s, s)
    bv = jax.random.uniform(kbv, (1, head_size), jnp.float32, -s, s)

    out = masked_head(x, wq, bq, wk, bk, wv, bv)
    out = jax.block_until_ready(out)

    ref = reference_masked_head(x, wq, bq, wk, bk, wv, bv)
    assert out.shape == (B, T, head_size)
    # Tolerance covers bf16 matmul inputs (f32 accumulation) + approx (EUP) softmax reciprocal.
    assert jnp.allclose(out, ref, atol=1e-2, rtol=1e-2), "mismatch vs reference"

    print("KERNEL_OK")
</pallas_src>

<mosaic_0001>
module attributes {stable_mosaic.version = 11 : i64} {
  func.func @masked_head_kernel(%arg0: i32, %arg1: memref<8x32xf32, #tpu.memory_space<vmem>>, %arg2: memref<32x384xbf16, #tpu.memory_space<vmem>>, %arg3: memref<1x384xf32, #tpu.memory_space<vmem>>, %arg4: memref<8x128xf32, #tpu.memory_space<vmem>>, %arg5: memref<8x384xf32, #tpu.memory_space<vmem>>) attributes {dimension_semantics = [#tpu.dimension_semantics<parallel>], iteration_bounds = array<i64: 4>, scalar_prefetch = 0 : i64, scratch_operands = 1 : i64, tpu.core_type = #tpu.core_type<tc>, window_params = [{transform_indices = @transform_0, window_bounds = array<i64: 8, 32>}, {pipeline_mode = #tpu.pipeline_mode<synchronous>, transform_indices = @transform_1, window_bounds = array<i64: 32, 384>}, {pipeline_mode = #tpu.pipeline_mode<synchronous>, transform_indices = @transform_2, window_bounds = array<i64: 1, 384>}, {transform_indices = @transform_3, window_bounds = array<i64: 8, 128>}]} {
    %c0 = arith.constant 0 : index
    %c0_0 = arith.constant 0 : index
    %0 = vector.load %arg1[%c0, %c0_0] : memref<8x32xf32, #tpu.memory_space<vmem>>, vector<8x32xf32>
    %1 = arith.truncf %0 : vector<8x32xf32> to vector<8x32xbf16>
    %c0_1 = arith.constant 0 : index
    %c0_2 = arith.constant 0 : index
    %2 = vector.load %arg2[%c0_1, %c0_2] : memref<32x384xbf16, #tpu.memory_space<vmem>>, vector<32x384xbf16>
    %cst = arith.constant dense<0.000000e+00> : vector<8x384xf32>
    %3 = tpu.matmul %1, %2, %cst {dimension_numbers = #tpu.dot_dimension_numbers<[1], [0], [0], [1], [0, 0, 1, 1], [], []>} : vector<8x32xbf16>, vector<32x384xbf16>, vector<8x384xf32> -> vector<8x384xf32>
    %c0_3 = arith.constant 0 : index
    %c0_4 = arith.constant 0 : index
    %4 = vector.load %arg3[%c0_3, %c0_4] : memref<1x384xf32, #tpu.memory_space<vmem>>, vector<1x384xf32>
    %5 = vector.broadcast %4 : vector<1x384xf32> to vector<8x384xf32>
    %6 = arith.addf %3, %5 : vector<8x384xf32>
    %c0_5 = arith.constant 0 : index
    %c0_6 = arith.constant 0 : index
    %7 = vector.load %arg5[%c0_5, %c0_6] : memref<8x384xf32, #tpu.memory_space<vmem>>, vector<8x384xf32>
    tpu.vector_store %arg5[%c0_5, %c0_6], %6 {strides = array<i32>} : memref<8x384xf32, #tpu.memory_space<vmem>>, vector<8x384xf32>,
    %8 = tpu.iota {dimensions = array<i32: 0>} : vector<8x8xi32>
    %9 = tpu.iota {dimensions = array<i32: 1>} : vector<8x8xi32>
    %10 = arith.cmpi sle, %9, %8 : vector<8x8xi32>
    %c0_i32 = arith.constant 0 : i32
    %c8_i32 = arith.constant 8 : i32
    %11 = arith.muli %c0_i32, %c8_i32 : i32
    %12 = tpu.assume_multiple %11, 8 : i32
    %13 = arith.index_cast %12 : i32 to index
    %c0_7 = arith.constant 0 : index
    %14 = vector.load %arg5[%13, %c0_7] : memref<8x384xf32, #tpu.memory_space<vmem>>, vector<8x128xf32>
    %15 = arith.truncf %14 : vector<8x128xf32> to vector<8x128xbf16>
    %16 = arith.index_cast %12 : i32 to index
    %c128 = arith.constant 128 : index
    %17 = vector.load %arg5[%16, %c128] : memref<8x384xf32, #tpu.memory_space<vmem>>, vector<8x128xf32>
    %18 = arith.truncf %17 : vector<8x128xf32> to vector<8x128xbf16>
    %19 = arith.index_cast %12 : i32 to index
    %c256 = arith.constant 256 : index
    %20 = vector.load %arg5[%19, %c256] : memref<8x384xf32, #tpu.memory_space<vmem>>, vector<8x128xf32>
    %21 = arith.truncf %20 : vector<8x128xf32> to vector<8x128xbf16>
    %cst_8 = arith.constant dense<0.000000e+00> : vector<8x8xf32>
    %22 = tpu.matmul %15, %18, %cst_8 {dimension_numbers = #tpu.dot_dimension_numbers<[1], [1], [0], [0], [0, 0, 1, 0], [], []>} : vector<8x128xbf16>, vector<8x128xbf16>, vector<8x8xf32> -> vector<8x8xf32>
    %cst_9 = arith.constant 0xFF800000 : f32
    %23 = vector.broadcast %cst_9 : f32 to vector<8x8xf32>
    %24 = arith.select %10, %22, %23 : vector<8x8xi1>, vector<8x8xf32>
    %cst_10 = arith.constant dense<0xFF800000> : vector<8xf32>
    %25 = vector.multi_reduction <maximumf>, %24, %cst_10 [1] : vector<8x8xf32> to vector<8xf32>
    %26 = vector.shape_cast %25 : vector<8xf32> to vector<8x1xf32>
    %27 = vector.broadcast %26 : vector<8x1xf32> to vector<8x8xf32>
    %28 = arith.subf %24, %27 : vector<8x8xf32>
    %29 = math.exp %28 : vector<8x8xf32>
    %cst_11 = arith.constant dense<0.000000e+00> : vector<8xf32>
    %30 = vector.multi_reduction <add>, %29, %cst_11 [1] : vector<8x8xf32> to vector<8xf32>
    %31 = vector.shape_cast %30 : vector<8xf32> to vector<8x1xf32>
    %32 = tpu.reciprocal %31 {approx = true} : vector<8x1xf32> -> vector<8x1xf32>
    %33 = vector.broadcast %32 : vector<8x1xf32> to vector<8x8xf32>
    %34 = arith.mulf %29, %33 : vector<8x8xf32>
    %35 = arith.truncf %34 : vector<8x8xf32> to vector<8x8xbf16>
    %cst_12 = arith.constant dense<0.000000e+00> : vector<8x128xf32>
    %36 = tpu.matmul %35, %21, %cst_12 {dimension_numbers = #tpu.dot_dimension_numbers<[1], [0], [0], [1], [0, 0, 1, 1], [], []>} : vector<8x8xbf16>, vector<8x128xbf16>, vector<8x128xf32> -> vector<8x128xf32>
    %37 = arith.index_cast %12 : i32 to index
    %c0_13 = arith.constant 0 : index
    %38 = vector.load %arg4[%37, %c0_13] : memref<8x128xf32, #tpu.memory_space<vmem>>, vector<8x128xf32>
    tpu.vector_store %arg4[%37, %c0_13], %36 {strides = array<i32>} : memref<8x128xf32, #tpu.memory_space<vmem>>, vector<8x128xf32>,
    %c1_i32 = arith.constant 1 : i32
    return
  }
  func.func @transform_0(%arg0: i32) -> (i32, i32) {
    %c0_i32 = arith.constant 0 : i32
    %c0_i32_0 = arith.constant 0 : i32
    return %arg0, %c0_i32 : i32, i32
  }
  func.func @transform_1(%arg0: i32) -> (i32, i32) {
    %c0_i32 = arith.constant 0 : i32
    %c0_i32_0 = arith.constant 0 : i32
    %c0_i32_1 = arith.constant 0 : i32
    return %c0_i32, %c0_i32_0 : i32, i32
  }
  func.func @transform_2(%arg0: i32) -> (i32, i32) {
    %c0_i32 = arith.constant 0 : i32
    %c0_i32_0 = arith.constant 0 : i32
    %c0_i32_1 = arith.constant 0 : i32
    return %c0_i32, %c0_i32_0 : i32, i32
  }
  func.func @transform_3(%arg0: i32) -> (i32, i32) {
    %c0_i32 = arith.constant 0 : i32
    %c0_i32_0 = arith.constant 0 : i32
    return %arg0, %c0_i32 : i32, i32
  }
}

</mosaic_0001>

<llo_original>
// kernel: tpu_custom_call.1
$region0: #{tpu_custom_call.1}
  #allocation0 [shape = 'u32[]', space=smem, size = 0x4, offset = 0x4, fixed_abs, tag = 'smem constant byte address 0x4 - core index']
  #allocation1 [shape = 'u32[144,128]{1,0:T(1,128)}', space=vmem, size = 0x12000, scoped, tag = 'internal scratch']
  #allocation2 [shape = 'f32[8,384]{1,0:T(8,128)}', space=vmem, size = 0x3000, scoped, tag = 'scratch operand']
  %s0 = inlined_call_operand.hbm [shape: f32[32,32], index: 0, kind: input, shape index: {}]
  %s1 = inlined_call_operand.hbm [shape: bf16[32,384], index: 1, kind: input, shape index: {}]
  %s2 = inlined_call_operand.vmem [shape: f32[1,384], index: 2, kind: input, shape index: {}]
  %s3 = inlined_call_operand.hbm [shape: f32[32,128], index: 3, kind: output, shape index: {}]
  %s4 = sld [smem:[#allocation0]]
  $region53: #{tpu_custom_call.1} parent=0
    _
  %s6 = ssub.s32 1, %s4
  %s7 = scalar_select 0, %s6, %s4
  $region1: #{tpu_custom_call.1} parent=0
    #allocation3 [shape = 'u8[8192]{0}', space=vmem, size = 0x2000, scoped, tag = 'input window, operand 0']
    #allocation4 [shape = 's32[2]{0}', space=sflag, size = 0x8, scoped, tag = 'scoped memory for tpu_custom_call.1']
    #allocation5 [shape = 's32[2]{0}', space=sflag, size = 0x8, scoped, tag = 'scoped memory for tpu_custom_call.1']
    #allocation6 [shape = 'u8[24576]{0}', space=vmem, size = 0x6000, scoped, tag = 'input window, operand 1, single buffered']
    #allocation7 [shape = 's32[1]{0}', space=sflag, size = 0x4, scoped, tag = 'scoped memory for tpu_custom_call.1']
    #allocation8 [shape = 'u8[8192]{0}', space=vmem, size = 0x2000, scoped, tag = 'output window, operand 0']
    %8 = vsyncpa [#allocation4], 0
    %s9 = scalar_lea.sflag [#allocation4], 1
    %10 = vsyncpa %s9, 0
    %11 = vsyncpa [#allocation7], 0
    %12 = vsyncpa [#allocation5], 0
    %s13 = scalar_lea.sflag [#allocation5], 1
    %14 = vsyncpa %s13, 0
    loop: start=0, step=1, limit=6
    $region2: #{tpu_custom_call.1} parent=1 // loop_pre_header
      _
    $region3: #{tpu_custom_call.1} parent=1 // loop_header
      %s16 = sphi 0, %s20
      %p17 = scmp.ge.s32.totalorder %s16, 6
      %s26 = sphi 0, %s28
      %s29 = sphi 0, %s26
      %s30 = sphi 0, %s29
      %s46 = sphi 0, %s30
      %s50 = sphi 0, %s50
      %s52 = sphi 0, %s50
      %s53 = sphi 0, %s52
      %s67 = sphi 0, %s53
      %s71 = sphi 0, %s71
      %s73 = sphi 0, %s71
      %s74 = sphi 0, %s73
      %s88 = sphi 0, %s74
      %s94 = sphi 0, %s96
      %s97 = sphi 0, %s94
      %s98 = sphi 0, %s97
      %s114 = sphi 0, %s98
    $region4: #{tpu_custom_call.1} parent=1 // loop_header_branch
      %19 = sbr.rel (%p17) target = $region8
    $region5: #{tpu_custom_call.1} parent=1 // loop_body
      %s21 = ssub.s32 %s16, 1
      %s22 = ssub.s32 %s16, 2
      %s23 = sadd.s32 %s16, 1
      %s24 = ssub.s32 %s16, %s23
      %p25 = scmp.eq.s32.totalorder %s24, 0
      %s27 = sadd.s32 %s26, 1
      %s28 = scalar_select %p25, %s26, %s27
      %p31 = pneg %p25
      %p32 = scmp.eq.s32.totalorder %s16, 3
      %p33 = por %p31, %p32
      %p34 = scmp.ne.s32.totalorder %s26, %s29
      %p35 = scmp.eq.s32.totalorder %s16, 0
      %p36 = por %p34, %p35
      %p37 = scmp.ne.s32.totalorder %s26, %s29
      %p38 = scmp.eq.s32.totalorder %s21, 3
      %p39 = por %p37, %p38
      %p40 = scmp.ne.s32.totalorder %s29, %s30
      %p41 = scmp.eq.s32.totalorder %s21, 0
      %p42 = por %p40, %p41
      %p43 = scmp.ne.s32.totalorder %s29, %s30
      %p44 = scmp.eq.s32.totalorder %s22, 3
      %p45 = por %p43, %p44
      %p47 = scmp.ne.s32.totalorder %s30, %s46
      %p48 = scmp.eq.s32.totalorder %s22, 0
      %p49 = por %p47, %p48
      %s51 = sadd.s32 %s50, 1
      %p54 = scmp.eq.s32.totalorder %s16, 3
      %p55 = scmp.ne.s32.totalorder %s50, %s52
      %p56 = scmp.eq.s32.totalorder %s16, 0
      %p57 = por %p55, %p56
      %p58 = scmp.ne.s32.totalorder %s50, %s52
      %p59 = scmp.eq.s32.totalorder %s21, 3
      %p60 = por %p58, %p59
      %p61 = scmp.ne.s32.totalorder %s52, %s53
      %p62 = scmp.eq.s32.totalorder %s21, 0
      %p63 = por %p61, %p62
      %p64 = scmp.ne.s32.totalorder %s52, %s53
      %p65 = scmp.eq.s32.totalorder %s22, 3
      %p66 = por %p64, %p65
      %p68 = scmp.ne.s32.totalorder %s53, %s67
      %p69 = scmp.eq.s32.totalorder %s22, 0
      %p70 = por %p68, %p69
      %s72 = sadd.s32 %s71, 1
      %p75 = scmp.eq.s32.totalorder %s16, 3
      %p76 = scmp.ne.s32.totalorder %s71, %s73
      %p77 = scmp.eq.s32.totalorder %s16, 0
      %p78 = por %p76, %p77
      %p79 = scmp.ne.s32.totalorder %s71, %s73
      %p80 = scmp.eq.s32.totalorder %s21, 3
      %p81 = por %p79, %p80
      %p82 = scmp.ne.s32.totalorder %s73, %s74
      %p83 = scmp.eq.s32.totalorder %s21, 0
      %p84 = por %p82, %p83
      %p85 = scmp.ne.s32.totalorder %s73, %s74
      %p86 = scmp.eq.s32.totalorder %s22, 3
      %p87 = por %p85, %p86
      %p89 = scmp.ne.s32.totalorder %s74, %s88
      %p90 = scmp.eq.s32.totalorder %s22, 0
      %p91 = por %p89, %p90
      %s92 = ssub.s32 %s16, %s23
      %p93 = scmp.eq.s32.totalorder %s92, 0
      %s95 = sadd.s32 %s94, 1
      %s96 = scalar_select %p93, %s94, %s95
      %p99 = pneg %p93
      %p100 = scmp.eq.s32.totalorder %s16, 3
      %p101 = por %p99, %p100
      %p102 = scmp.ne.s32.totalorder %s94, %s97
      %p103 = scmp.eq.s32.totalorder %s16, 0
      %p104 = por %p102, %p103
      %p105 = scmp.ne.s32.totalorder %s94, %s97
      %p106 = scmp.eq.s32.totalorder %s21, 3
      %p107 = por %p105, %p106
      %p108 = scmp.ne.s32.totalorder %s97, %s98
      %p109 = scmp.eq.s32.totalorder %s21, 0
      %p110 = por %p108, %p109
      %p111 = scmp.ne.s32.totalorder %s97, %s98
      %p112 = scmp.eq.s32.totalorder %s22, 3
      %p113 = por %p111, %p112
      %p115 = scmp.ne.s32.totalorder %s98, %s114
      %p116 = scmp.eq.s32.totalorder %s22, 0
      %p117 = por %p115, %p116
      %p118 = scmp.le.s32.totalorder 1, %s16
      %p119 = scmp.lt.s32.totalorder %s16, 5
      %p120 = pnand %p118, %p119
      %p121 = pneg %p120
      // Predicated region
      $region9: #{tpu_custom_call.1} parent=5 // pred_check
        _
      $region10: #{tpu_custom_call.1} parent=5 // pred_check_branch
        %123 = sbr.rel (%p120) target = $region12
      $region11: #{tpu_custom_call.1} parent=5 // pred_region
        %s124 = ssub.s32 %s16, 1
        // Predicated region
        $region13: #{tpu_custom_call.1} parent=11 // pred_check
          %p125 = pneg %p63
        $region14: #{tpu_custom_call.1} parent=11 // pred_check_branch
          %127 = sbr.rel (%p125) target = $region16
        $region15: #{tpu_custom_call.1} parent=11 // pred_region
          %s129 = ssub.s32 768, 768
          %130 = vsyncadd [#allocation7], %s129
          %s131 = sshll.u32 [#allocation6], 4
          %s132 = int_to_ptr.vmem [resolvable:$true] %s131
          %137 = dma.hbm_to_vmem [thread:$0]  %s1, 768, %s132, [#allocation7], 192, 192, 12
        $region16: #{tpu_custom_call.1} parent=11 // pred_fallthru
          _
        // Predicated region
        $region17: #{tpu_custom_call.1} parent=11 // pred_check
          %p138 = pneg %p84
        $region18: #{tpu_custom_call.1} parent=11 // pred_check_branch
          %140 = sbr.rel (%p138) target = $region20
        $region19: #{tpu_custom_call.1} parent=11 // pred_region
          _
        $region20: #{tpu_custom_call.1} parent=11 // pred_fallthru
          _
      $region12: #{tpu_custom_call.1} parent=5 // pred_fallthru
        _
      %p141 = scmp.lt.s32.totalorder %s16, 4
      // Predicated region
      $region21: #{tpu_custom_call.1} parent=5 // pred_check
        %p142 = pneg %p141
      $region22: #{tpu_custom_call.1} parent=5 // pred_check_branch
        %144 = sbr.rel (%p142) target = $region24
      $region23: #{tpu_custom_call.1} parent=5 // pred_region
        // Predicated region
        $region25: #{tpu_custom_call.1} parent=23 // pred_check
          %p145 = pneg %p36
        $region26: #{tpu_custom_call.1} parent=23 // pred_check_branch
          %147 = sbr.rel (%p145) target = $region28
        $region27: #{tpu_custom_call.1} parent=23 // pred_region
          %s148 = sand.u32 %s26, 1
          %s149 = scalar_lea.sflag [#allocation4], %s148
          %s150 = sand.u32 %s26, 1
          %s151 = smul.addr %s150, 8
          %s152 = scalar_lea.vmem [#allocation3], %s151
          %s154 = ssub.s32 128, 128
          %155 = vsyncadd %s149, %s154
          %s156 = smul.addr %s16, 128
          %s157 = scalar_lea.hbm %s0, %s156
          %s159 = sshll.u32 %s152, 4
          %s160 = int_to_ptr.vmem [resolvable:$true] %s159
          %162 = dma.hbm_to_vmem [thread:$0]  %s157, 128, %s160, %s149
        $region28: #{tpu_custom_call.1} parent=23 // pred_fallthru
          _
      $region24: #{tpu_custom_call.1} parent=5 // pred_fallthru
        _
      %p163 = scmp.le.s32.totalorder 1, %s16
      %p164 = scmp.lt.s32.totalorder %s16, 5
      %p165 = pnand %p163, %p164
      %p166 = pneg %p165
      // Predicated region
      $region29: #{tpu_custom_call.1} parent=5 // pred_check
        _
      $region30: #{tpu_custom_call.1} parent=5 // pred_check_branch
        %168 = sbr.rel (%p165) target = $region32
      $region31: #{tpu_custom_call.1} parent=5 // pred_region
        %s169 = ssub.s32 %s16, 1
        %s170 = sand.u32 %s29, 1
        %s171 = scalar_lea.sflag [#allocation4], %s170
        %s172 = sand.u32 %s29, 1
        %s173 = smul.addr %s172, 8
        %s174 = scalar_lea.vmem [#allocation3], %s173
        // Predicated region
        $region33: #{tpu_custom_call.1} parent=31 // pred_check
          %p175 = pneg %p42
        $region34: #{tpu_custom_call.1} parent=31 // pred_check_branch
          %177 = sbr.rel (%p175) target = $region36
        $region35: #{tpu_custom_call.1} parent=31 // pred_region
          %178 = dma.done %s171, 128
        $region36: #{tpu_custom_call.1} parent=31 // pred_fallthru
          _
        // Predicated region
        $region37: #{tpu_custom_call.1} parent=31 // pred_check
          %p179 = pneg %p63
        $region38: #{tpu_custom_call.1} parent=31 // pred_check_branch
          %181 = sbr.rel (%p179) target = $region40
        $region39: #{tpu_custom_call.1} parent=31 // pred_region
          %182 = dma.done [#allocation7], 768
        $region40: #{tpu_custom_call.1} parent=31 // pred_fallthru
          _
        %s183 = sand.u32 %s29, 1
        %s184 = scalar_lea.sflag [#allocation4], %s183
        %s185 = sand.u32 %s29, 1
        %s186 = smul.addr %s185, 8
        %s187 = scalar_lea.vmem [#allocation3], %s186
        %p188 = pneg %p42
        %p189 = pneg %p39
        %p190 = pneg %p63
        %p191 = pneg %p60
        %p192 = pneg %p84
        %p193 = pneg %p81
        %p194 = pneg %p110
        %p195 = pneg %p107
        %s196 = sand.u32 %s97, 1
        %s197 = scalar_lea.sflag [#allocation5], %s196
        %s198 = sand.u32 %s97, 1
        %s199 = smul.addr %s198, 8
        %s200 = scalar_lea.vmem [#allocation8], %s199
        %v202 = vld [vmem:[%s174] sm:$0xff]
        %v203 = vpack.c.bf16 %v202, %v202
        %v204 = vld [vmem:[#allocation6] sm:$0xff]
        %v205 = vld [vmem:[#allocation6 + $0x8] sm:$0xf]
        %v206 = vld [vmem:[#allocation6 + $0xc] sm:$0xff]
        %v207 = vld [vmem:[#allocation6 + $0x14] sm:$0xf]
        %v208 = vld [vmem:[#allocation6 + $0x18] sm:$0xff]
        %v209 = vld [vmem:[#allocation6 + $0x20] sm:$0xf]
        %v210 = vld [vmem:[#allocation6 + $0x24] sm:$0xff]
        %v211 = vld [vmem:[#allocation6 + $0x2c] sm:$0xf]
        %v212 = vld [vmem:[%s2] sm:$0x7]
        %v214 = vlaneseq
        %v215 = vshrl.u32 %v214, 7
        %v216 = vsub.s32 0, %v215
        %v217 = vrot.slane %v212, %v216
        %v218 = vlaneseq
        %v219 = vshrl.u32 %v218, 7
        %v220 = vsub.s32 1, %v219
        %v221 = vrot.slane %v212, %v220
        %v222 = vlaneseq
        %v223 = vshrl.u32 %v222, 7
        %v224 = vsub.s32 2, %v223
        %v225 = vrot.slane %v212, %v224
        %v237 = vunpack.c.l.b16 %v204
        %v238 = vunpack.c.h.b16 %v204
        %v239 = vunpack.c.l.b16 %v205
        %v240 = vunpack.c.l.b16 %v206
        %v241 = vunpack.c.h.b16 %v206
        %v242 = vunpack.c.l.b16 %v207
        %v243 = vunpack.c.l.b16 %v208
        %v244 = vunpack.c.h.b16 %v208
        %v245 = vunpack.c.l.b16 %v209
        %v246 = vunpack.c.l.b16 %v210
        %v247 = vunpack.c.h.b16 %v210
        %v248 = vunpack.c.l.b16 %v211
        %v249 = vpack.c.b16 %v240, %v237
        %v250 = vpack.c.b16 %v241, %v238
        %v251 = vpack.c.b16 %v242, %v239
        %v252 = vpack.c.b16 %v246, %v243
        %v253 = vpack.c.b16 %v247, %v244
        %v254 = vpack.c.b16 %v248, %v245
        %vm261 = vcmask 261120
        %v263 = vsel %vm261, %v203, 0
        %265 = vmatprep.subr.bf16.mxu0 %v250
        %266 = vmatpush1.bf16.msra.mxu0 %v249
        %267 = vmatprep.subr.bf16.mxu0 %v253
        %268 = vmatpush1.bf16.msra.mxu0 %v252
        %269 = vmatprep.subr.bf16.mxu0 0
        %270 = vmatpush1.bf16.msra.mxu0 0
        %271 = vmatprep.subr.bf16.mxu0 0
        %272 = vmatpush1.bf16.msra.mxu0 0
        %273 = vmatprep.subr.bf16.mxu0 0
        %274 = vmatpush1.bf16.msra.mxu0 0
        %275 = vmatprep.subr.bf16.mxu0 0
        %276 = vmatpush1.bf16.msra.mxu0 0
        %277 = vmatprep.subr.bf16.mxu0 0
        %278 = vmatpush1.bf16.msra.mxu0 0
        %279 = vmatprep.subr.bf16.mxu0 0
        %280 = vmatpush1.bf16.msra.mxu0 0
        %281 = vmatprep.subr.bf16.mxu0 0
        %282 = vmatpush1.bf16.msra.mxu0 0
        %283 = vmatprep.subr.bf16.mxu0 0
        %284 = vmatpush1.bf16.msra.mxu0 0
        %285 = vmatprep.subr.bf16.mxu0 0
        %286 = vmatpush1.bf16.msra.mxu0 0
        %287 = vmatprep.subr.bf16.mxu0 0
        %288 = vmatpush1.bf16.msra.mxu0 0
        %289 = vmatprep.subr.bf16.mxu0 0
        %290 = vmatpush1.bf16.msra.mxu0 0
        %291 = vmatprep.subr.bf16.mxu0 0
        %292 = vmatpush1.bf16.msra.mxu0 0
        %293 = vmatprep.subr.bf16.mxu0 0
        %294 = vmatpush1.bf16.msra.mxu0 0
        %295 = vmatprep.subr.bf16.mxu0 0
        %296 = vmatpush1.bf16.msra.mxu0 0
        %297 = vmatprep.mubr.bf16.mxu0 0
        %298 = vmatmul.mubr.bf16.gmra.mrb[0].mxu0 %v263
        %v299 = vpop.f32.mrb[0].mxu0
        %v300 = vadd.f32 %v217, %v299
        %v301 = vpop.f32.mrb[0].mxu0
        %v302 = vadd.f32 %v221, %v301
        %v303 = vpop.f32.mrb[0].mxu0
        %v304 = vpop.f32.mrb[0].mxu0
        %305 = vdwg.mxu0
        %306 = vmatprep.subr.bf16.mxu0 0
        %307 = vmatpush1.bf16.msra.mxu0 %v251
        %308 = vmatprep.subr.bf16.mxu0 0
        %309 = vmatpush1.bf16.msra.mxu0 %v254
        %310 = vmatprep.subr.bf16.mxu0 0
        %311 = vmatpush1.bf16.msra.mxu0 0
        %312 = vmatprep.subr.bf16.mxu0 0
        %313 = vmatpush1.bf16.msra.mxu0 0
        %314 = vmatprep.subr.bf16.mxu0 0
        %315 = vmatpush1.bf16.msra.mxu0 0
        %316 = vmatprep.subr.bf16.mxu0 0
        %317 = vmatpush1.bf16.msra.mxu0 0
        %318 = vmatprep.subr.bf16.mxu0 0
        %319 = vmatpush1.bf16.msra.mxu0 0
        %320 = vmatprep.subr.bf16.mxu0 0
        %321 = vmatpush1.bf16.msra.mxu0 0
        %322 = vmatprep.subr.bf16.mxu0 0
        %323 = vmatpush1.bf16.msra.mxu0 0
        %324 = vmatprep.subr.bf16.mxu0 0
        %325 = vmatpush1.bf16.msra.mxu0 0
        %326 = vmatprep.subr.bf16.mxu0 0
        %327 = vmatpush1.bf16.msra.mxu0 0
        %328 = vmatprep.subr.bf16.mxu0 0
        %329 = vmatpush1.bf16.msra.mxu0 0
        %330 = vmatprep.subr.bf16.mxu0 0
        %331 = vmatpush1.bf16.msra.mxu0 0
        %332 = vmatprep.subr.bf16.mxu0 0
        %333 = vmatpush1.bf16.msra.mxu0 0
        %334 = vmatprep.subr.bf16.mxu0 0
        %335 = vmatpush1.bf16.msra.mxu0 0
        %336 = vmatprep.subr.bf16.mxu0 0
        %337 = vmatpush1.bf16.msra.mxu0 0
        %338 = vmatprep.mubr.bf16.mxu0 0
        %339 = vmatmul.mubr.bf16.gmra.mrb[0].mxu0 %v263
        %v340 = vpop.f32.mrb[0].mxu0
        %v341 = vadd.f32 %v225, %v340
        %v342 = vpop.f32.mrb[0].mxu0
        %v343 = vpop.f32.mrb[0].mxu0
        %v344 = vpop.f32.mrb[0].mxu0
        %345 = vdwg.mxu0
        %346 = vst [vmem:[#allocation2] sm:$0xff] %v300
        %347 = vst [vmem:[#allocation2 + $0x8] sm:$0xff] %v302
        %348 = vst [vmem:[#allocation2 + $0x10] sm:$0xff] %v341
        %v349 = vlaneseq
        %v350 = vshrl.u32 %v349, 7
        %v351 = vlaneseq
        %v352 = vand.u32 %v351, 127
        %vm353 = vcmp.le.s32.totalorder %v352, %v350
        %s354 = smul.u32 0, 3
        %s355 = smul.addr %s354, 8
        %s356 = scalar_lea.vmem [#allocation2], %s355
        %v357 = vld [vmem:[%s356] sm:$0xff]
        %v358 = vpack.c.bf16 %v357, %v357
        %v359 = vld [vmem:[%s356 + $0x8] sm:$0xff]
        %v360 = vpack.c.bf16 %v359, %v359
        %v361 = vld [vmem:[%s356 + $0x10] sm:$0xff]
        %v362 = vpack.c.bf16 %v361, %v361
        %363 = vmatprep.subr.bf16.mxu0 0
        %364 = vmatpush1.bf16.xpose.msra.mxu0 %v360
        %365 = vmatprep.subr.bf16.mxu0 0
        %366 = vmatpush1.bf16.xpose.msra.mxu0 0
        %367 = vmatprep.subr.bf16.mxu0 0
        %368 = vmatpush1.bf16.xpose.msra.mxu0 0
        %369 = vmatprep.subr.bf16.mxu0 0
        %370 = vmatpush1.bf16.xpose.msra.mxu0 0
        %371 = vmatprep.subr.bf16.mxu0 0
        %372 = vmatpush1.bf16.xpose.msra.mxu0 0
        %373 = vmatprep.subr.bf16.mxu0 0
        %374 = vmatpush1.bf16.xpose.msra.mxu0 0
        %375 = vmatprep.subr.bf16.mxu0 0
        %376 = vmatpush1.bf16.xpose.msra.mxu0 0
        %377 = vmatprep.subr.bf16.mxu0 0
        %378 = vmatpush1.bf16.xpose.msra.mxu0 0
        %379 = vmatprep.subr.bf16.mxu0 0
        %380 = vmatpush1.bf16.xpose.msra.mxu0 0
        %381 = vmatprep.subr.bf16.mxu0 0
        %382 = vmatpush1.bf16.xpose.msra.mxu0 0
        %383 = vmatprep.subr.bf16.mxu0 0
        %384 = vmatpush1.bf16.xpose.msra.mxu0 0
        %385 = vmatprep.subr.bf16.mxu0 0
        %386 = vmatpush1.bf16.xpose.msra.mxu0 0
        %387 = vmatprep.subr.bf16.mxu0 0
        %388 = vmatpush1.bf16.xpose.msra.mxu0 0
        %389 = vmatprep.subr.bf16.mxu0 0
        %390 = vmatpush1.bf16.xpose.msra.mxu0 0
        %391 = vmatprep.subr.bf16.mxu0 0
        %392 = vmatpush1.bf16.xpose.msra.mxu0 0
        %393 = vmatprep.subr.bf16.mxu0 0
        %394 = vmatpush1.bf16.xpose.msra.mxu0 0
        %395 = vmatprep.mubr.bf16.mxu0 0
        %396 = vmatmul.mubr.bf16.gmra.mrb[0].mxu0 %v358
        %v397 = vpop.f32.mrb[0].mxu0
        %v398 = vadd.f32 0.0, %v397
        %v399 = vpop.f32.mrb[0].mxu0
        %v400 = vpop.f32.mrb[0].mxu0
        %v401 = vpop.f32.mrb[0].mxu0
        %402 = vdwg.mxu0
        %v403 = vsel %vm353, %v398, -inf
        %vm404 = vcmask 64512
        %v405 = vsel %vm404, %v403, -inf
        %406 = vmax.xlane.f32.xlu0 %v405
        %v407 = vpop.xlane.xlu0 %406
        %v408 = vsub.f32 %v403, %v407
        %v409 = vmul.f32 %v408, 1.442695
        %v410 = vpow.pop %v409
        %v411 = vsel %vm404, %v410, 0.0
        %412 = vadd.xlane.f32.xlu0 %v411
        %v413 = vpop.xlane.xlu0 %412
        %v414 = vrcp.pop %v413
        %v415 = vmul.f32 %v410, %v414
        %v416 = vpack.c.bf16 %v415, %v415
        %v418 = vsel %vm404, %v416, 0
        %vm420 = vcmask 1043456
        %v422 = vsel %vm420, %v362, 0
        %424 = vmatprep.subr.bf16.mxu0 0
        %425 = vmatpush1.bf16.msra.mxu0 %v422
        %426 = vmatprep.subr.bf16.mxu0 0
        %427 = vmatpush1.bf16.msra.mxu0 0
        %428 = vmatprep.subr.bf16.mxu0 0
        %429 = vmatpush1.bf16.msra.mxu0 0
        %430 = vmatprep.subr.bf16.mxu0 0
        %431 = vmatpush1.bf16.msra.mxu0 0
        %432 = vmatprep.subr.bf16.mxu0 0
        %433 = vmatpush1.bf16.msra.mxu0 0
        %434 = vmatprep.subr.bf16.mxu0 0
        %435 = vmatpush1.bf16.msra.mxu0 0
        %436 = vmatprep.subr.bf16.mxu0 0
        %437 = vmatpush1.bf16.msra.mxu0 0
        %438 = vmatprep.subr.bf16.mxu0 0
        %439 = vmatpush1.bf16.msra.mxu0 0
        %440 = vmatprep.subr.bf16.mxu0 0
        %441 = vmatpush1.bf16.msra.mxu0 0
        %442 = vmatprep.subr.bf16.mxu0 0
        %443 = vmatpush1.bf16.msra.mxu0 0
        %444 = vmatprep.subr.bf16.mxu0 0
        %445 = vmatpush1.bf16.msra.mxu0 0
        %446 = vmatprep.subr.bf16.mxu0 0
        %447 = vmatpush1.bf16.msra.mxu0 0
        %448 = vmatprep.subr.bf16.mxu0 0
        %449 = vmatpush1.bf16.msra.mxu0 0
        %450 = vmatprep.subr.bf16.mxu0 0
        %451 = vmatpush1.bf16.msra.mxu0 0
        %452 = vmatprep.subr.bf16.mxu0 0
        %453 = vmatpush1.bf16.msra.mxu0 0
        %454 = vmatprep.subr.bf16.mxu0 0
        %455 = vmatpush1.bf16.msra.mxu0 0
        %456 = vmatprep.mubr.bf16.mxu0 0
        %457 = vmatmul.mubr.bf16.gmra.mrb[0].mxu0 %v418
        %v458 = vpop.f32.mrb[0].mxu0
        %v459 = vadd.f32 0.0, %v458
        %v460 = vpop.f32.mrb[0].mxu0
        %v461 = vpop.f32.mrb[0].mxu0
        %v462 = vpop.f32.mrb[0].mxu0
        %463 = vdwg.mxu0
        %464 = vst [vmem:[%s200] sm:$0xff] %v459
        %s465 = sand.u32 %s97, 1
        %s466 = scalar_lea.sflag [#allocation5], %s465
        %s467 = sand.u32 %s97, 1
        %s468 = smul.addr %s467, 8
        %s469 = scalar_lea.vmem [#allocation8], %s468
        // Predicated region
        $region41: #{tpu_custom_call.1} parent=31 // pred_check
          %p470 = pneg %p107
        $region42: #{tpu_custom_call.1} parent=31 // pred_check_branch
          %472 = sbr.rel (%p470) target = $region44
        $region43: #{tpu_custom_call.1} parent=31 // pred_region
          %s474 = ssub.s32 128, 128
          %475 = vsyncadd %s466, %s474
          %s476 = smul.addr %s21, 128
          %s477 = scalar_lea.hbm %s3, %s476
          %s479 = sshll.u32 %s469, 4
          %s480 = int_to_ptr.vmem [resolvable:$true] %s479
          %482 = dma.vmem_to_hbm [thread:$0]  %s480, 128, %s477, %s466
        $region44: #{tpu_custom_call.1} parent=31 // pred_fallthru
          _
      $region32: #{tpu_custom_call.1} parent=5 // pred_fallthru
        _
      %p483 = scmp.le.s32.totalorder 2, %s16
      // Predicated region
      $region45: #{tpu_custom_call.1} parent=5 // pred_check
        %p484 = pneg %p483
      $region46: #{tpu_custom_call.1} parent=5 // pred_check_branch
        %486 = sbr.rel (%p484) target = $region48
      $region47: #{tpu_custom_call.1} parent=5 // pred_region
        %s487 = ssub.s32 %s16, 2
        // Predicated region
        $region49: #{tpu_custom_call.1} parent=47 // pred_check
          %p488 = pneg %p113
        $region50: #{tpu_custom_call.1} parent=47 // pred_check_branch
          %490 = sbr.rel (%p488) target = $region52
        $region51: #{tpu_custom_call.1} parent=47 // pred_region
          %s491 = sand.u32 %s98, 1
          %s492 = scalar_lea.sflag [#allocation5], %s491
          %s493 = sand.u32 %s98, 1
          %s494 = smul.addr %s493, 8
          %s495 = scalar_lea.vmem [#allocation8], %s494
          %496 = dma.done %s492, 128
        $region52: #{tpu_custom_call.1} parent=47 // pred_fallthru
          _
      $region48: #{tpu_custom_call.1} parent=5 // pred_fallthru
        _
    $region6: #{tpu_custom_call.1} parent=1 // loop_footer
      %s20 = sadd.s32 1, %s16
    $region7: #{tpu_custom_call.1} parent=1 // loop_footer_branch
      %15 = sbr.rel target = $region3
    $region8: #{tpu_custom_call.1} parent=1 // loop_exit
      _
    %497 = vsyncpa [#allocation4], 1
    %s498 = scalar_lea.sflag [#allocation4], 1
    %499 = vsyncpa %s498, 1
    %500 = vsyncpa [#allocation7], 1
    %501 = vsyncpa [#allocation5], 1
    %s502 = scalar_lea.sflag [#allocation5], 1
    %503 = vsyncpa %s502, 1

</llo_original>
